<compile_context>
chip_gen: v7x
topology: tpu7x:2x2x1
jax: 0.10.0
libtpu: 0.0.40
codegen_flags: <defaults>
</compile_context>

<pallas_src>
import jax
import jax.numpy as jnp
from jax.experimental import pallas as pl
from jax.experimental.pallas import tpu as pltpu

_LANES = 128
_MAX_TILE_ROWS = 2048  # (2048, 128) f32 block = 1 MiB; safe on v5e/v6e/v7x


def _relu2_kernel(x_ref, y_ref, ox_ref, oy_ref):
    # Pure VPU elementwise max on both tiles; one grid step handles one tile
    # of each tensor, so both ReLUs share a single kernel launch / pipeline.
    ox_ref[...] = jnp.maximum(x_ref[...], jnp.zeros((), x_ref.dtype))
    oy_ref[...] = jnp.maximum(y_ref[...], jnp.zeros((), y_ref.dtype))


def _round_up(n, m):
    return ((n + m - 1) // m) * m


def _min_sublanes(dtype):
    # Sub-32-bit dtypes pack along sublanes: bf16 -> 16 rows, int8 -> 32 rows.
    itemsize = jnp.dtype(dtype).itemsize
    return 8 * max(1, 4 // itemsize)


def _split_lane_dense(a):
    """Flatten `a` and split into a lane-dense (n//128, 128) main slab plus a
    (< 128,)-element tail.  No padding copies are made."""
    flat = a.reshape(-1)
    n = flat.size
    n_main = (n // _LANES) * _LANES
    main2d = flat[:n_main].reshape(n_main // _LANES, _LANES)
    tail = flat[n_main:]
    return main2d, tail


def _fused_relu_2d(x2d, y2d):
    mx, my = x2d.shape[0], y2d.shape[0]

    # Equalized grids: one shared grid length; per-tensor block rows sized so
    # both tensors are covered.  In the common case (similar sizes) every
    # block index is real -> index_map is (i, 0), no revisits, axis stays
    # "parallel" (shardable across TensorCores on multi-TC chips).
    grid_len = max(pl.cdiv(mx, _MAX_TILE_ROWS), pl.cdiv(my, _MAX_TILE_ROWS), 1)

    def geom(m, dtype):
        rows = _round_up(max(pl.cdiv(m, grid_len), 1), _min_sublanes(dtype))
        n_real_blocks = pl.cdiv(m, rows)
        return rows, n_real_blocks

    rx, nbx = geom(mx, x2d.dtype)
    ry, nby = geom(my, y2d.dtype)

    def make_spec(rows, n_real_blocks):
        if n_real_blocks >= grid_len:
            return pl.BlockSpec((rows, _LANES), lambda i: (i, 0))
        # Rare fallback (very mismatched tensor sizes): clamp to the last real
        # block.  Harmless revisit because ReLU is idempotent.
        last = n_real_blocks - 1
        return pl.BlockSpec((rows, _LANES), lambda i: (jnp.minimum(i, last), 0))

    clamped = (nbx < grid_len) or (nby < grid_len)
    sem = ("arbitrary",) if clamped else ("parallel",)

    return pl.pallas_call(
        _relu2_kernel,
        out_shape=(jax.ShapeDtypeStruct(x2d.shape, x2d.dtype),
                   jax.ShapeDtypeStruct(y2d.shape, y2d.dtype)),
        grid=(grid_len,),
        in_specs=[make_spec(rx, nbx), make_spec(ry, nby)],
        out_specs=(make_spec(rx, nbx), make_spec(ry, nby)),
        compiler_params=pltpu.CompilerParams(dimension_semantics=sem),
    )(x2d, y2d)


@jax.jit
def model_forward(x, y):
    """Pallas equivalent of Model.forward: (relu(x), relu(y)).
    F.dropout3d(..., training=False) is the identity -> nothing to compute."""
    x_main, x_tail = _split_lane_dense(x)
    y_main, y_tail = _split_lane_dense(y)

    if x_main.shape[0] > 0 and y_main.shape[0] > 0:
        ox_main, oy_main = _fused_relu_2d(x_main, y_main)
    else:
        # Degenerate tiny inputs (< 128 elements total): not worth a kernel.
        ox_main = jnp.maximum(x_main, jnp.zeros((), x_main.dtype))
        oy_main = jnp.maximum(y_main, jnp.zeros((), y_main.dtype))

    def _assemble(main2d, tail, shape):
        flat_main = main2d.reshape(-1)
        if tail.size == 0:
            return flat_main.reshape(shape)
        # Ragged tail (< 128 elements): handled by XLA so the Pallas blocks
        # stay lane/sublane dense and fully pipelined.
        tail_out = jnp.maximum(tail, jnp.zeros((), tail.dtype))
        return jnp.concatenate([flat_main, tail_out]).reshape(shape)

    return _assemble(ox_main, x_tail, x.shape), _assemble(oy_main, y_tail, y.shape)


if __name__ == "__main__":
    key = jax.random.PRNGKey(0)
    kx, ky = jax.random.split(key)

    # Small NCDHW 5-D inputs (as F.dropout3d expects).  Element counts are
    # multiples of 8*128 so the lane-dense reshape is exact (no ragged tails).
    x = jax.random.normal(kx, (2, 4, 4, 8, 16), dtype=jnp.float32)
    y = jax.random.normal(ky, (2, 3, 4, 8, 16), dtype=jnp.float32)

    out_x, out_y = model_forward(x, y)
    jax.block_until_ready((out_x, out_y))

    # Correctness check against plain JAX reference.
    ref_x = jnp.maximum(x, 0.0)
    ref_y = jnp.maximum(y, 0.0)
    assert out_x.shape == x.shape and out_y.shape == y.shape
    assert jnp.allclose(out_x, ref_x)
    assert jnp.allclose(out_y, ref_y)

    print("KERNEL_OK")
</pallas_src>

<mosaic_0001>
module attributes {stable_mosaic.version = 11 : i64} {
  func.func @_relu2_kernel(%arg0: i32, %arg1: memref<32x128xf32, #tpu.memory_space<vmem>>, %arg2: memref<24x128xf32, #tpu.memory_space<vmem>>, %arg3: memref<32x128xf32, #tpu.memory_space<vmem>>, %arg4: memref<24x128xf32, #tpu.memory_space<vmem>>) attributes {dimension_semantics = [#tpu.dimension_semantics<parallel>], iteration_bounds = array<i64: 1>, scalar_prefetch = 0 : i64, scratch_operands = 0 : i64, tpu.core_type = #tpu.core_type<tc>, window_params = [{transform_indices = @transform_0, window_bounds = array<i64: 32, 128>}, {transform_indices = @transform_1, window_bounds = array<i64: 24, 128>}, {transform_indices = @transform_2, window_bounds = array<i64: 32, 128>}, {transform_indices = @transform_3, window_bounds = array<i64: 24, 128>}]} {
    %c0 = arith.constant 0 : index
    %c0_0 = arith.constant 0 : index
    %0 = vector.load %arg1[%c0, %c0_0] : memref<32x128xf32, #tpu.memory_space<vmem>>, vector<32x128xf32>
    %cst = arith.constant 0.000000e+00 : f32
    %1 = vector.broadcast %cst : f32 to vector<32x128xf32>
    %2 = arith.maximumf %0, %1 : vector<32x128xf32>
    %c0_1 = arith.constant 0 : index
    %c0_2 = arith.constant 0 : index
    %3 = vector.load %arg3[%c0_1, %c0_2] : memref<32x128xf32, #tpu.memory_space<vmem>>, vector<32x128xf32>
    tpu.vector_store %arg3[%c0_1, %c0_2], %2 {strides = array<i32>} : memref<32x128xf32, #tpu.memory_space<vmem>>, vector<32x128xf32>,
    %c0_3 = arith.constant 0 : index
    %c0_4 = arith.constant 0 : index
    %4 = vector.load %arg2[%c0_3, %c0_4] : memref<24x128xf32, #tpu.memory_space<vmem>>, vector<24x128xf32>
    %cst_5 = arith.constant 0.000000e+00 : f32
    %5 = vector.broadcast %cst_5 : f32 to vector<24x128xf32>
    %6 = arith.maximumf %4, %5 : vector<24x128xf32>
    %c0_6 = arith.constant 0 : index
    %c0_7 = arith.constant 0 : index
    %7 = vector.load %arg4[%c0_6, %c0_7] : memref<24x128xf32, #tpu.memory_space<vmem>>, vector<24x128xf32>
    tpu.vector_store %arg4[%c0_6, %c0_7], %6 {strides = array<i32>} : memref<24x128xf32, #tpu.memory_space<vmem>>, vector<24x128xf32>,
    return
  }
  func.func @transform_0(%arg0: i32) -> (i32, i32) {
    %c0_i32 = arith.constant 0 : i32
    %c0_i32_0 = arith.constant 0 : i32
    return %arg0, %c0_i32 : i32, i32
  }
  func.func @transform_1(%arg0: i32) -> (i32, i32) {
    %c0_i32 = arith.constant 0 : i32
    %c0_i32_0 = arith.constant 0 : i32
    return %arg0, %c0_i32 : i32, i32
  }
  func.func @transform_2(%arg0: i32) -> (i32, i32) {
    %c0_i32 = arith.constant 0 : i32
    %c0_i32_0 = arith.constant 0 : i32
    return %arg0, %c0_i32 : i32, i32
  }
  func.func @transform_3(%arg0: i32) -> (i32, i32) {
    %c0_i32 = arith.constant 0 : i32
    %c0_i32_0 = arith.constant 0 : i32
    return %arg0, %c0_i32 : i32, i32
  }
}

</mosaic_0001>

<llo_original>
// kernel: model_forward.1
$region0: #{model_forward.1}
  #allocation0 [shape = 'u32[]', space=smem, size = 0x4, offset = 0x4, fixed_abs, tag = 'smem constant byte address 0x4 - core index']
  #allocation1 [shape = 'u32[144,128]{1,0:T(1,128)}', space=vmem, size = 0x12000, scoped, tag = 'internal scratch']
  %s0 = inlined_call_operand.vmem [shape: f32[32,128], index: 0, kind: input, shape index: {}]
  %s1 = inlined_call_operand.vmem [shape: f32[24,128], index: 1, kind: input, shape index: {}]
  %s2 = inlined_call_operand.vmem [shape: f32[32,128], index: 2, kind: output, shape index: {0}]
  %s3 = inlined_call_operand.vmem [shape: f32[24,128], index: 3, kind: output, shape index: {1}]
  %4 = xla_tuple %s2, %s3
  %s5 = sld [smem:[#allocation0]]
  $region26: #{model_forward.1} parent=0
    _
  %s7 = ssub.s32 1, %s5
  %s8 = scalar_select 0, %s7, %s5
  // Predicated region
  $region2: #{model_forward.1} parent=0 // pred_check
    _
  $region3: #{model_forward.1} parent=0 // pred_check_branch
    %10 = sbr.rel (0) target = $region5
  $region4: #{model_forward.1} parent=0 // pred_region
    _
  $region5: #{model_forward.1} parent=0 // pred_fallthru
    _
  // Predicated region
  $region6: #{model_forward.1} parent=0 // pred_check
    _
  $region7: #{model_forward.1} parent=0 // pred_check_branch
    %12 = sbr.rel (0) target = $region9
  $region8: #{model_forward.1} parent=0 // pred_region
    _
  $region9: #{model_forward.1} parent=0 // pred_fallthru
    _
  %v13 = vld [vmem:[%s0] sm:$0xff]
  %v14 = vld [vmem:[%s0 + $0x8] sm:$0xff]
  %v15 = vld [vmem:[%s0 + $0x10] sm:$0xff]
  %v16 = vld [vmem:[%s0 + $0x18] sm:$0xff]
  %v17 = vmax.f32 %v13, 0.0
  %v18 = vmax.f32 %v14, 0.0
  %v19 = vmax.f32 %v15, 0.0
  %v20 = vmax.f32 %v16, 0.0
  %21 = vst [vmem:[%s2] sm:$0xff] %v17
  %22 = vst [vmem:[%s2 + $0x8] sm:$0xff] %v18
  %23 = vst [vmem:[%s2 + $0x10] sm:$0xff] %v19
  %24 = vst [vmem:[%s2 + $0x18] sm:$0xff] %v20
  %v25 = vld [vmem:[%s1] sm:$0xff]
  %v26 = vld [vmem:[%s1 + $0x8] sm:$0xff]
  %v27 = vld [vmem:[%s1 + $0x10] sm:$0xff]
  %v28 = vmax.f32 %v25, 0.0
  %v29 = vmax.f32 %v26, 0.0
  %v30 = vmax.f32 %v27, 0.0
  %31 = vst [vmem:[%s3] sm:$0xff] %v28
  %32 = vst [vmem:[%s3 + $0x8] sm:$0xff] %v29
  %33 = vst [vmem:[%s3 + $0x10] sm:$0xff] %v30
  // Predicated region
  $region10: #{model_forward.1} parent=0 // pred_check
    _
  $region11: #{model_forward.1} parent=0 // pred_check_branch
    %35 = sbr.rel (0) target = $region13
  $region12: #{model_forward.1} parent=0 // pred_region
    _
  $region13: #{model_forward.1} parent=0 // pred_fallthru
    _
  // Predicated region
  $region14: #{model_forward.1} parent=0 // pred_check
    _
  $region15: #{model_forward.1} parent=0 // pred_check_branch
    %37 = sbr.rel (0) target = $region17
  $region16: #{model_forward.1} parent=0 // pred_region
    _
  $region17: #{model_forward.1} parent=0 // pred_fallthru
    _
  // Predicated region
  $region18: #{model_forward.1} parent=0 // pred_check
    _
  $region19: #{model_forward.1} parent=0 // pred_check_branch
    %39 = sbr.rel (0) target = $region21
  $region20: #{model_forward.1} parent=0 // pred_region
    _
  $region21: #{model_forward.1} parent=0 // pred_fallthru
    _
  // Predicated region
  $region22: #{model_forward.1} parent=0 // pred_check
    _
  $region23: #{model_forward.1} parent=0 // pred_check_branch
    %41 = sbr.rel (0) target = $region25
  $region24: #{model_forward.1} parent=0 // pred_region
    _
  $region25: #{model_forward.1} parent=0 // pred_fallthru
    _

</llo_original>
